<compile_context>
chip_gen: v7x
topology: tpu7x:2x2x1
jax: 0.10.0
libtpu: 0.0.40
codegen_flags: <defaults>
</compile_context>

<pallas_src>
import functools

import jax
import jax.numpy as jnp
from jax.experimental import pallas as pl
from jax.experimental.pallas import tpu as pltpu

C_UM_PER_PS = 299.792458       # speed of light, micrometres / picosecond
_PARAMS_PER_LAYER = 6          # [n*D/c, k*D/c, n, k, Re(1/n~), Im(1/n~)]


def _cmul(ar, ai, br, bi):
    """Complex multiply on (real, imag) pairs."""
    return ar * br - ai * bi, ar * bi + ai * br


def tmm_kernel(par_ref, in_ref, out_ref, *, num_layers, b_clamp):
    """Per-frequency TMM transmission applied to the reference spectrum.

    par_ref: (B * L * 6,) f32 SMEM  -- per-layer scalars, precomputed on host
    in_ref : (3, rows, 128) f32 VMEM -- [omega, Re E_ref', Im E_ref'] lane-dense
             (E_ref' already carries the vacuum-phase removal factor)
    out_ref: (1, 2, rows, 128) f32 VMEM -- [Re E_sim, Im E_sim] for this batch
    """
    batch = pl.program_id(0)
    base = batch * (num_layers * _PARAMS_PER_LAYER)

    w = in_ref[0]          # (rows, 128) angular frequency [rad/ps]
    er = in_ref[1]
    ei = in_ref[2]

    def layer_mat(l):
        off = base + l * _PARAMS_PER_LAYER
        a_coef = par_ref[off + 0]      # n * D / c
        b_coef = par_ref[off + 1]      # k * D / c
        n = par_ref[off + 2]
        k = par_ref[off + 3]
        invn_r = par_ref[off + 4]      # Re 1/(n + ik)
        invn_i = par_ref[off + 5]      # Im 1/(n + ik)

        # complex phase delta = (n + i k) * w * D / c = a + i b
        a = a_coef * w
        b = jnp.clip(b_coef * w, -b_clamp, b_clamp)

        ca, sa = jnp.cos(a), jnp.sin(a)
        eb = jnp.exp(b)
        emb = jnp.exp(-b)              # exact (EUP slot is idle); no cancellation
        chb = 0.5 * (eb + emb)
        shb = 0.5 * (eb - emb)

        # cos(a+ib), sin(a+ib)
        cos_r, cos_i = ca * chb, -sa * shb
        sin_r, sin_i = sa * chb, ca * shb

        # i * sin(delta)
        is_r, is_i = -sin_i, sin_r

        # layer characteristic matrix [[A, B], [C, A]]
        B_r, B_i = _cmul(is_r, is_i, invn_r, invn_i)   # i sin(d) / n~
        C_r, C_i = _cmul(is_r, is_i, n, k)             # i n~ sin(d)
        return cos_r, cos_i, B_r, B_i, C_r, C_i

    # Initialize M directly with layer 0's matrix (skip identity warm-up).
    A_r, A_i, B_r, B_i, C_r, C_i = layer_mat(0)
    m00r, m00i = A_r, A_i
    m01r, m01i = B_r, B_i
    m10r, m10i = C_r, C_i
    m11r, m11i = A_r, A_i

    for l in range(1, num_layers):                 # static, small layer count
        A_r, A_i, B_r, B_i, C_r, C_i = layer_mat(l)

        # M <- M @ L,  L = [[A, B], [C, A]]  (elementwise over frequencies)
        n00r, n00i = _cmul(m00r, m00i, A_r, A_i)
        t_r, t_i = _cmul(m01r, m01i, C_r, C_i)
        n00r, n00i = n00r + t_r, n00i + t_i

        n01r, n01i = _cmul(m00r, m00i, B_r, B_i)
        t_r, t_i = _cmul(m01r, m01i, A_r, A_i)
        n01r, n01i = n01r + t_r, n01i + t_i

        n10r, n10i = _cmul(m10r, m10i, A_r, A_i)
        t_r, t_i = _cmul(m11r, m11i, C_r, C_i)
        n10r, n10i = n10r + t_r, n10i + t_i

        n11r, n11i = _cmul(m10r, m10i, B_r, B_i)
        t_r, t_i = _cmul(m11r, m11i, A_r, A_i)
        n11r, n11i = n11r + t_r, n11i + t_i

        m00r, m00i, m01r, m01i = n00r, n00i, n01r, n01i
        m10r, m10i, m11r, m11i = n10r, n10i, n11r, n11i

    # transmission (vacuum on both sides):  t = 2 / (M00 + M01 + M10 + M11)
    sr = m00r + m01r + m10r + m11r
    si = m00i + m01i + m10i + m11i
    smag = sr * sr + si * si
    inv = pl.reciprocal(smag, approx=True)
    inv = inv * (2.0 - smag * inv)          # one Newton step -> ~f32-exact
    tr = (2.0 * sr) * inv
    ti = (-2.0 * si) * inv

    # vacuum-phase removal already folded into (er, ei) on the host:
    # E_sim(w) = t(w) * E_ref'(w)
    out_r, out_i = _cmul(tr, ti, er, ei)
    out_ref[0, 0] = out_r
    out_ref[0, 1] = out_i


def _make_forward(reference_pulse, deltat, d_values, noise_level, noise_key):
    """Hoists all per-call constants (rfft, omega, folded vacuum phase, noise,
    D/c) and returns jitted forward(n, k) and forward_batched(n_b, k_b)."""
    N = int(reference_pulse.shape[0])
    F = N // 2 + 1                        # rfft bins
    rows = pl.cdiv(F, 128)                # lane-dense rows (3 for N=512)
    F_pad = rows * 128
    pad = F_pad - F

    num_layers = len(d_values)
    d_over_c = jnp.asarray([float(D) / C_UM_PER_PS for D in d_values],
                           jnp.float32)                              # (L,)
    d_total_over_c = float(sum(float(D) / C_UM_PER_PS for D in d_values))
    # per-layer clamp on Im(delta) so chained cosh/sinh products stay in f32
    b_clamp = 40.0 / max(num_layers, 1)

    ref = reference_pulse.astype(jnp.float32)
    omega = (2.0 * jnp.pi * jnp.fft.rfftfreq(N, d=deltat)).astype(jnp.float32)
    eref = jnp.fft.rfft(ref)                                         # (F,)
    # Fold the n,k-independent vacuum-phase removal exp(+i w d_total/c) into
    # the reference spectrum (constant work hoisted out of the kernel).
    # TODO(synk): sign convention unverified against the missing
    # simulate_parallel source; standard numpy exp(-i w t) FFT convention used.
    eref = eref * jnp.exp(1j * omega * d_total_over_c)

    omega_p = jnp.pad(omega, (0, pad)).reshape(rows, 128)
    er_p = jnp.pad(jnp.real(eref).astype(jnp.float32), (0, pad)).reshape(rows, 128)
    ei_p = jnp.pad(jnp.imag(eref).astype(jnp.float32), (0, pad)).reshape(rows, 128)
    packed = jnp.stack([omega_p, er_p, ei_p], axis=0)                # (3, rows, 128)

    # TODO(synk): torch's simulate_parallel presumably draws fresh noise each
    # call; a fixed, hoisted noise vector is used here (deterministic).
    noise = noise_level * jax.random.normal(noise_key, (N,), dtype=jnp.float32)

    kernel = functools.partial(tmm_kernel, num_layers=num_layers,
                               b_clamp=b_clamp)

    def tmm_call(batch):
        return pl.pallas_call(
            kernel,
            grid=(batch,),
            out_shape=jax.ShapeDtypeStruct((batch, 2, rows, 128), jnp.float32),
            in_specs=[
                pl.BlockSpec(memory_space=pltpu.MemorySpace.SMEM),   # layer scalars
                pl.BlockSpec((3, rows, 128), lambda b: (0, 0, 0)),   # spectrum (reused)
            ],
            out_specs=pl.BlockSpec((1, 2, rows, 128), lambda b: (b, 0, 0, 0)),
            compiler_params=pltpu.CompilerParams(
                dimension_semantics=("parallel",)),   # uses both v7x TensorCores
        )

    def _pack_params(n_b, k_b):
        # (B, L) -> flat (B*L*6,) per-layer scalars; the divides run here (XLA
        # scalar work) instead of being broadcast onto the VPU inside the kernel.
        n_b = n_b.astype(jnp.float32)
        k_b = k_b.astype(jnp.float32)
        a_coef = n_b * d_over_c
        b_coef = k_b * d_over_c
        den = n_b * n_b + k_b * k_b
        invn_r = n_b / den
        invn_i = -k_b / den
        par = jnp.stack([a_coef, b_coef, n_b, k_b, invn_r, invn_i], axis=-1)
        return par.reshape(-1)

    def _forward_batched(n_b, k_b):
        B = n_b.shape[0]
        par = _pack_params(n_b, k_b)
        out = tmm_call(B)(par, packed)                    # (B, 2, rows, 128)
        esim = (out[:, 0] + 1j * out[:, 1]).reshape(B, F_pad)[:, :F]
        y = jnp.fft.irfft(esim, n=N, axis=-1).astype(jnp.float32)
        return y + noise[None, :]                         # (B, N)

    forward_batched = jax.jit(_forward_batched)
    forward = jax.jit(lambda n_arr, k_arr: _forward_batched(n_arr[None],
                                                            k_arr[None])[0])

    # TODO(synk): for jax.grad-based n/k fitting wrap tmm_call in a custom_vjp
    # whose backward is a second small VPU kernel reusing the same layout.
    return forward, forward_batched, noise


def gen_loss_function(y_simulated, y_exp, alpha):
    """alpha * sqrt(mse(y_simulated, y_exp)) -- mirrors the PyTorch loss."""
    return alpha * jnp.sqrt(jnp.mean((y_simulated - y_exp) ** 2))


class LayeredExtractorNK:
    """JAX/Pallas mirror of the PyTorch module's forward pass."""

    def __init__(self, reference_pulse, experimental_pulse, deltat, layers_init,
                 noise_level=0.002):
        self.reference_pulse = jnp.asarray(reference_pulse, jnp.float32)
        self.experimental_pulse = jnp.asarray(experimental_pulse, jnp.float32)
        self.deltat = float(deltat)
        # parameters: real / imag parts of the complex index, per layer
        self.n_params = jnp.array([float(layer[0].real) for layer in layers_init],
                                  dtype=jnp.float32)
        self.k_params = jnp.array([float(layer[0].imag) for layer in layers_init],
                                  dtype=jnp.float32)
        self.D_values = [float(layer[1]) for layer in layers_init]
        fwd, fwd_b, noise = _make_forward(self.reference_pulse, self.deltat,
                                          self.D_values, noise_level,
                                          jax.random.PRNGKey(42))
        self._forward = fwd
        self._forward_batched = fwd_b
        self.noise = noise

    def forward(self):
        return self._forward(self.n_params, self.k_params)

    def forward_batched(self, n_batch, k_batch):
        """Evaluate B candidate (n, k) vectors in one dispatch (grid=(B,))."""
        return self._forward_batched(n_batch, k_batch)

    def loss_function(self, y_simulated, alpha=1.0):
        return gen_loss_function(y_simulated, self.experimental_pulse, alpha)


def _reference_forward(reference_pulse, deltat, d_values, n_arr, k_arr, noise):
    """Pure-JAX complex TMM reference for correctness checking."""
    N = reference_pulse.shape[0]
    eref = jnp.fft.rfft(reference_pulse.astype(jnp.float32))
    omega = (2.0 * jnp.pi * jnp.fft.rfftfreq(N, d=deltat)).astype(jnp.float32)
    one = jnp.ones_like(eref)
    zero = jnp.zeros_like(eref)
    M00, M01, M10, M11 = one, zero, zero, one
    d_total = 0.0
    for n, k, D in zip(n_arr, k_arr, d_values):
        nt = complex(float(n), float(k))
        doc = float(D) / C_UM_PER_PS
        delta = nt * doc * omega
        A = jnp.cos(delta)
        B = 1j * jnp.sin(delta) / nt
        C = 1j * nt * jnp.sin(delta)
        n00 = M00 * A + M01 * C
        n01 = M00 * B + M01 * A
        n10 = M10 * A + M11 * C
        n11 = M10 * B + M11 * A
        M00, M01, M10, M11 = n00, n01, n10, n11
        d_total += doc
    t = 2.0 / (M00 + M01 + M10 + M11)
    H = t * jnp.exp(1j * omega * d_total)
    y = jnp.fft.irfft(H * eref, n=N).astype(jnp.float32)
    return y + noise


if __name__ == "__main__":
    N = 512                       # time samples
    deltat = 0.05                 # ps per sample

    # deterministic synthetic reference THz pulse: Gaussian-modulated cosine
    key = jax.random.PRNGKey(0)
    t = jnp.arange(N, dtype=jnp.float32) * deltat
    t0, sigma, f0 = 5.0, 0.4, 1.0
    ref_pulse = jnp.exp(-((t - t0) ** 2) / (2 * sigma ** 2)) * \
        jnp.cos(2.0 * jnp.pi * f0 * (t - t0))
    ref_pulse = ref_pulse + 0.01 * jax.random.normal(key, (N,), jnp.float32)

    # "experimental" pulse: deterministic perturbation of the reference
    exp_pulse = jnp.roll(ref_pulse, 7) * 0.8

    # two layers: (complex index, thickness in micrometres)
    layers_init = [(1.9 + 0.05j, 100.0), (3.4 + 0.02j, 50.0)]

    model = LayeredExtractorNK(ref_pulse, exp_pulse, deltat, layers_init)

    # single forward pass (module semantics)
    y_sim = model.forward()
    jax.block_until_ready(y_sim)
    loss = model.loss_function(y_sim, alpha=1.0)
    jax.block_until_ready(loss)

    assert y_sim.shape == (N,) and y_sim.dtype == jnp.float32
    assert bool(jnp.all(jnp.isfinite(y_sim)))
    assert bool(jnp.isfinite(loss))

    # numerical check vs. a pure-JAX complex TMM reference
    y_ref = _reference_forward(ref_pulse, deltat, model.D_values,
                               model.n_params, model.k_params, model.noise)
    err = float(jnp.max(jnp.abs(y_sim - y_ref)))
    scale = float(jnp.max(jnp.abs(y_ref))) + 1e-12
    assert err <= 2e-3 * scale, f"kernel/reference mismatch: {err} vs {scale}"

    # batched candidate evaluation (amortizes dispatch; parallel grid axis)
    B = 4
    L = len(model.D_values)
    dn = 0.05 * jax.random.normal(jax.random.PRNGKey(1), (B, L), jnp.float32)
    n_b = model.n_params[None, :] + dn
    k_b = jnp.broadcast_to(model.k_params, (B, L))
    y_b = model.forward_batched(n_b, k_b)
    jax.block_until_ready(y_b)
    assert y_b.shape == (B, N)
    assert bool(jnp.all(jnp.isfinite(y_b)))

    print("KERNEL_OK")
</pallas_src>

<mosaic_0001>
module attributes {stable_mosaic.version = 11 : i64} {
  func.func @tmm_kernel(%arg0: i32, %arg1: memref<12xf32, #tpu.memory_space<smem>>, %arg2: memref<3x3x128xf32, #tpu.memory_space<vmem>>, %arg3: memref<1x2x3x128xf32, #tpu.memory_space<vmem>>) attributes {dimension_semantics = [#tpu.dimension_semantics<parallel>], iteration_bounds = array<i64: 1>, scalar_prefetch = 0 : i64, scratch_operands = 0 : i64, tpu.core_type = #tpu.core_type<tc>, window_params = [{transform_indices = @transform_0, window_bounds = array<i64: 12>}, {pipeline_mode = #tpu.pipeline_mode<synchronous>, transform_indices = @transform_1, window_bounds = array<i64: 3, 3, 128>}, {transform_indices = @transform_2, window_bounds = array<i64: 1, 2, 3, 128>}]} {
    %c12_i32 = arith.constant 12 : i32
    %0 = arith.muli %arg0, %c12_i32 : i32
    %c0 = arith.constant 0 : index
    %c0_0 = arith.constant 0 : index
    %c0_1 = arith.constant 0 : index
    %1 = vector.load %arg2[%c0, %c0_0, %c0_1] : memref<3x3x128xf32, #tpu.memory_space<vmem>>, vector<1x3x128xf32>
    %2 = vector.shape_cast %1 : vector<1x3x128xf32> to vector<3x128xf32>
    %c1 = arith.constant 1 : index
    %c0_2 = arith.constant 0 : index
    %c0_3 = arith.constant 0 : index
    %3 = vector.load %arg2[%c1, %c0_2, %c0_3] : memref<3x3x128xf32, #tpu.memory_space<vmem>>, vector<1x3x128xf32>
    %4 = vector.shape_cast %3 : vector<1x3x128xf32> to vector<3x128xf32>
    %c2 = arith.constant 2 : index
    %c0_4 = arith.constant 0 : index
    %c0_5 = arith.constant 0 : index
    %5 = vector.load %arg2[%c2, %c0_4, %c0_5] : memref<3x3x128xf32, #tpu.memory_space<vmem>>, vector<1x3x128xf32>
    %6 = vector.shape_cast %5 : vector<1x3x128xf32> to vector<3x128xf32>
    %c0_i32 = arith.constant 0 : i32
    %7 = arith.addi %0, %c0_i32 : i32
    %c0_i32_6 = arith.constant 0 : i32
    %8 = arith.addi %7, %c0_i32_6 : i32
    %9 = arith.index_cast %8 : i32 to index
    %10 = memref.load %arg1[%9] : memref<12xf32, #tpu.memory_space<smem>>
    %c1_i32 = arith.constant 1 : i32
    %11 = arith.addi %7, %c1_i32 : i32
    %12 = arith.index_cast %11 : i32 to index
    %13 = memref.load %arg1[%12] : memref<12xf32, #tpu.memory_space<smem>>
    %c2_i32 = arith.constant 2 : i32
    %14 = arith.addi %7, %c2_i32 : i32
    %15 = arith.index_cast %14 : i32 to index
    %16 = memref.load %arg1[%15] : memref<12xf32, #tpu.memory_space<smem>>
    %c3_i32 = arith.constant 3 : i32
    %17 = arith.addi %7, %c3_i32 : i32
    %18 = arith.index_cast %17 : i32 to index
    %19 = memref.load %arg1[%18] : memref<12xf32, #tpu.memory_space<smem>>
    %c4_i32 = arith.constant 4 : i32
    %20 = arith.addi %7, %c4_i32 : i32
    %21 = arith.index_cast %20 : i32 to index
    %22 = memref.load %arg1[%21] : memref<12xf32, #tpu.memory_space<smem>>
    %c5_i32 = arith.constant 5 : i32
    %23 = arith.addi %7, %c5_i32 : i32
    %24 = arith.index_cast %23 : i32 to index
    %25 = memref.load %arg1[%24] : memref<12xf32, #tpu.memory_space<smem>>
    %26 = vector.broadcast %10 : f32 to vector<3x128xf32>
    %27 = arith.mulf %26, %2 : vector<3x128xf32>
    %28 = vector.broadcast %13 : f32 to vector<3x128xf32>
    %29 = arith.mulf %28, %2 : vector<3x128xf32>
    %cst = arith.constant -2.000000e+01 : f32
    %cst_7 = arith.constant 2.000000e+01 : f32
    %30 = vector.broadcast %cst : f32 to vector<3x128xf32>
    %31 = arith.maximumf %30, %29 : vector<3x128xf32>
    %32 = vector.broadcast %cst_7 : f32 to vector<3x128xf32>
    %33 = arith.minimumf %32, %31 : vector<3x128xf32>
    %34 = math.cos %27 : vector<3x128xf32>
    %35 = math.sin %27 : vector<3x128xf32>
    %36 = math.exp %33 : vector<3x128xf32>
    %cst_8 = arith.constant 0.000000e+00 : f32
    %37 = vector.broadcast %cst_8 : f32 to vector<3x128xf32>
    %38 = arith.subf %37, %33 : vector<3x128xf32>
    %39 = math.exp %38 : vector<3x128xf32>
    %40 = arith.addf %36, %39 : vector<3x128xf32>
    %cst_9 = arith.constant 5.000000e-01 : f32
    %41 = vector.broadcast %cst_9 : f32 to vector<3x128xf32>
    %42 = arith.mulf %41, %40 : vector<3x128xf32>
    %43 = arith.subf %36, %39 : vector<3x128xf32>
    %cst_10 = arith.constant 5.000000e-01 : f32
    %44 = vector.broadcast %cst_10 : f32 to vector<3x128xf32>
    %45 = arith.mulf %44, %43 : vector<3x128xf32>
    %46 = arith.mulf %34, %42 : vector<3x128xf32>
    %cst_11 = arith.constant 0.000000e+00 : f32
    %47 = vector.broadcast %cst_11 : f32 to vector<3x128xf32>
    %48 = arith.subf %47, %35 : vector<3x128xf32>
    %49 = arith.mulf %48, %45 : vector<3x128xf32>
    %50 = arith.mulf %35, %42 : vector<3x128xf32>
    %51 = arith.mulf %34, %45 : vector<3x128xf32>
    %cst_12 = arith.constant 0.000000e+00 : f32
    %52 = vector.broadcast %cst_12 : f32 to vector<3x128xf32>
    %53 = arith.subf %52, %51 : vector<3x128xf32>
    %54 = vector.broadcast %22 : f32 to vector<3x128xf32>
    %55 = arith.mulf %53, %54 : vector<3x128xf32>
    %56 = vector.broadcast %25 : f32 to vector<3x128xf32>
    %57 = arith.mulf %50, %56 : vector<3x128xf32>
    %58 = arith.subf %55, %57 : vector<3x128xf32>
    %59 = vector.broadcast %25 : f32 to vector<3x128xf32>
    %60 = arith.mulf %53, %59 : vector<3x128xf32>
    %61 = vector.broadcast %22 : f32 to vector<3x128xf32>
    %62 = arith.mulf %50, %61 : vector<3x128xf32>
    %63 = arith.addf %60, %62 : vector<3x128xf32>
    %64 = vector.broadcast %16 : f32 to vector<3x128xf32>
    %65 = arith.mulf %53, %64 : vector<3x128xf32>
    %66 = vector.broadcast %19 : f32 to vector<3x128xf32>
    %67 = arith.mulf %50, %66 : vector<3x128xf32>
    %68 = arith.subf %65, %67 : vector<3x128xf32>
    %69 = vector.broadcast %19 : f32 to vector<3x128xf32>
    %70 = arith.mulf %53, %69 : vector<3x128xf32>
    %71 = vector.broadcast %16 : f32 to vector<3x128xf32>
    %72 = arith.mulf %50, %71 : vector<3x128xf32>
    %73 = arith.addf %70, %72 : vector<3x128xf32>
    %c6_i32 = arith.constant 6 : i32
    %74 = arith.addi %0, %c6_i32 : i32
    %c0_i32_13 = arith.constant 0 : i32
    %75 = arith.addi %74, %c0_i32_13 : i32
    %76 = arith.index_cast %75 : i32 to index
    %77 = memref.load %arg1[%76] : memref<12xf32, #tpu.memory_space<smem>>
    %c1_i32_14 = arith.constant 1 : i32
    %78 = arith.addi %74, %c1_i32_14 : i32
    %79 = arith.index_cast %78 : i32 to index
    %80 = memref.load %arg1[%79] : memref<12xf32, #tpu.memory_space<smem>>
    %c2_i32_15 = arith.constant 2 : i32
    %81 = arith.addi %74, %c2_i32_15 : i32
    %82 = arith.index_cast %81 : i32 to index
    %83 = memref.load %arg1[%82] : memref<12xf32, #tpu.memory_space<smem>>
    %c3_i32_16 = arith.constant 3 : i32
    %84 = arith.addi %74, %c3_i32_16 : i32
    %85 = arith.index_cast %84 : i32 to index
    %86 = memref.load %arg1[%85] : memref<12xf32, #tpu.memory_space<smem>>
    %c4_i32_17 = arith.constant 4 : i32
    %87 = arith.addi %74, %c4_i32_17 : i32
    %88 = arith.index_cast %87 : i32 to index
    %89 = memref.load %arg1[%88] : memref<12xf32, #tpu.memory_space<smem>>
    %c5_i32_18 = arith.constant 5 : i32
    %90 = arith.addi %74, %c5_i32_18 : i32
    %91 = arith.index_cast %90 : i32 to index
    %92 = memref.load %arg1[%91] : memref<12xf32, #tpu.memory_space<smem>>
    %93 = vector.broadcast %77 : f32 to vector<3x128xf32>
    %94 = arith.mulf %93, %2 : vector<3x128xf32>
    %95 = vector.broadcast %80 : f32 to vector<3x128xf32>
    %96 = arith.mulf %95, %2 : vector<3x128xf32>
    %cst_19 = arith.constant -2.000000e+01 : f32
    %cst_20 = arith.constant 2.000000e+01 : f32
    %97 = vector.broadcast %cst_19 : f32 to vector<3x128xf32>
    %98 = arith.maximumf %97, %96 : vector<3x128xf32>
    %99 = vector.broadcast %cst_20 : f32 to vector<3x128xf32>
    %100 = arith.minimumf %99, %98 : vector<3x128xf32>
    %101 = math.cos %94 : vector<3x128xf32>
    %102 = math.sin %94 : vector<3x128xf32>
    %103 = math.exp %100 : vector<3x128xf32>
    %cst_21 = arith.constant 0.000000e+00 : f32
    %104 = vector.broadcast %cst_21 : f32 to vector<3x128xf32>
    %105 = arith.subf %104, %100 : vector<3x128xf32>
    %106 = math.exp %105 : vector<3x128xf32>
    %107 = arith.addf %103, %106 : vector<3x128xf32>
    %cst_22 = arith.constant 5.000000e-01 : f32
    %108 = vector.broadcast %cst_22 : f32 to vector<3x128xf32>
    %109 = arith.mulf %108, %107 : vector<3x128xf32>
    %110 = arith.subf %103, %106 : vector<3x128xf32>
    %cst_23 = arith.constant 5.000000e-01 : f32
    %111 = vector.broadcast %cst_23 : f32 to vector<3x128xf32>
    %112 = arith.mulf %111, %110 : vector<3x128xf32>
    %113 = arith.mulf %101, %109 : vector<3x128xf32>
    %cst_24 = arith.constant 0.000000e+00 : f32
    %114 = vector.broadcast %cst_24 : f32 to vector<3x128xf32>
    %115 = arith.subf %114, %102 : vector<3x128xf32>
    %116 = arith.mulf %115, %112 : vector<3x128xf32>
    %117 = arith.mulf %102, %109 : vector<3x128xf32>
    %118 = arith.mulf %101, %112 : vector<3x128xf32>
    %cst_25 = arith.constant 0.000000e+00 : f32
    %119 = vector.broadcast %cst_25 : f32 to vector<3x128xf32>
    %120 = arith.subf %119, %118 : vector<3x128xf32>
    %121 = vector.broadcast %89 : f32 to vector<3x128xf32>
    %122 = arith.mulf %120, %121 : vector<3x128xf32>
    %123 = vector.broadcast %92 : f32 to vector<3x128xf32>
    %124 = arith.mulf %117, %123 : vector<3x128xf32>
    %125 = arith.subf %122, %124 : vector<3x128xf32>
    %126 = vector.broadcast %92 : f32 to vector<3x128xf32>
    %127 = arith.mulf %120, %126 : vector<3x128xf32>
    %128 = vector.broadcast %89 : f32 to vector<3x128xf32>
    %129 = arith.mulf %117, %128 : vector<3x128xf32>
    %130 = arith.addf %127, %129 : vector<3x128xf32>
    %131 = vector.broadcast %83 : f32 to vector<3x128xf32>
    %132 = arith.mulf %120, %131 : vector<3x128xf32>
    %133 = vector.broadcast %86 : f32 to vector<3x128xf32>
    %134 = arith.mulf %117, %133 : vector<3x128xf32>
    %135 = arith.subf %132, %134 : vector<3x128xf32>
    %136 = vector.broadcast %86 : f32 to vector<3x128xf32>
    %137 = arith.mulf %120, %136 : vector<3x128xf32>
    %138 = vector.broadcast %83 : f32 to vector<3x128xf32>
    %139 = arith.mulf %117, %138 : vector<3x128xf32>
    %140 = arith.addf %137, %139 : vector<3x128xf32>
    %141 = arith.mulf %46, %113 : vector<3x128xf32>
    %142 = arith.mulf %49, %116 : vector<3x128xf32>
    %143 = arith.subf %141, %142 : vector<3x128xf32>
    %144 = arith.mulf %46, %116 : vector<3x128xf32>
    %145 = arith.mulf %49, %113 : vector<3x128xf32>
    %146 = arith.addf %144, %145 : vector<3x128xf32>
    %147 = arith.mulf %58, %135 : vector<3x128xf32>
    %148 = arith.mulf %63, %140 : vector<3x128xf32>
    %149 = arith.subf %147, %148 : vector<3x128xf32>
    %150 = arith.mulf %58, %140 : vector<3x128xf32>
    %151 = arith.mulf %63, %135 : vector<3x128xf32>
    %152 = arith.addf %150, %151 : vector<3x128xf32>
    %153 = arith.addf %143, %149 : vector<3x128xf32>
    %154 = arith.addf %146, %152 : vector<3x128xf32>
    %155 = arith.mulf %46, %125 : vector<3x128xf32>
    %156 = arith.mulf %49, %130 : vector<3x128xf32>
    %157 = arith.subf %155, %156 : vector<3x128xf32>
    %158 = arith.mulf %46, %130 : vector<3x128xf32>
    %159 = arith.mulf %49, %125 : vector<3x128xf32>
    %160 = arith.addf %158, %159 : vector<3x128xf32>
    %161 = arith.mulf %58, %113 : vector<3x128xf32>
    %162 = arith.mulf %63, %116 : vector<3x128xf32>
    %163 = arith.subf %161, %162 : vector<3x128xf32>
    %164 = arith.mulf %58, %116 : vector<3x128xf32>
    %165 = arith.mulf %63, %113 : vector<3x128xf32>
    %166 = arith.addf %164, %165 : vector<3x128xf32>
    %167 = arith.addf %157, %163 : vector<3x128xf32>
    %168 = arith.addf %160, %166 : vector<3x128xf32>
    %169 = arith.mulf %68, %113 : vector<3x128xf32>
    %170 = arith.mulf %73, %116 : vector<3x128xf32>
    %171 = arith.subf %169, %170 : vector<3x128xf32>
    %172 = arith.mulf %68, %116 : vector<3x128xf32>
    %173 = arith.mulf %73, %113 : vector<3x128xf32>
    %174 = arith.addf %172, %173 : vector<3x128xf32>
    %175 = arith.mulf %46, %135 : vector<3x128xf32>
    %176 = arith.mulf %49, %140 : vector<3x128xf32>
    %177 = arith.subf %175, %176 : vector<3x128xf32>
    %178 = arith.mulf %46, %140 : vector<3x128xf32>
    %179 = arith.mulf %49, %135 : vector<3x128xf32>
    %180 = arith.addf %178, %179 : vector<3x128xf32>
    %181 = arith.addf %171, %177 : vector<3x128xf32>
    %182 = arith.addf %174, %180 : vector<3x128xf32>
    %183 = arith.mulf %68, %125 : vector<3x128xf32>
    %184 = arith.mulf %73, %130 : vector<3x128xf32>
    %185 = arith.subf %183, %184 : vector<3x128xf32>
    %186 = arith.mulf %68, %130 : vector<3x128xf32>
    %187 = arith.mulf %73, %125 : vector<3x128xf32>
    %188 = arith.addf %186, %187 : vector<3x128xf32>
    %189 = arith.mulf %46, %113 : vector<3x128xf32>
    %190 = arith.mulf %49, %116 : vector<3x128xf32>
    %191 = arith.subf %189, %190 : vector<3x128xf32>
    %192 = arith.mulf %46, %116 : vector<3x128xf32>
    %193 = arith.mulf %49, %113 : vector<3x128xf32>
    %194 = arith.addf %192, %193 : vector<3x128xf32>
    %195 = arith.addf %185, %191 : vector<3x128xf32>
    %196 = arith.addf %188, %194 : vector<3x128xf32>
    %197 = arith.addf %153, %167 : vector<3x128xf32>
    %198 = arith.addf %197, %181 : vector<3x128xf32>
    %199 = arith.addf %198, %195 : vector<3x128xf32>
    %200 = arith.addf %154, %168 : vector<3x128xf32>
    %201 = arith.addf %200, %182 : vector<3x128xf32>
    %202 = arith.addf %201, %196 : vector<3x128xf32>
    %203 = arith.mulf %199, %199 : vector<3x128xf32>
    %204 = arith.mulf %202, %202 : vector<3x128xf32>
    %205 = arith.addf %203, %204 : vector<3x128xf32>
    %206 = tpu.reciprocal %205 {approx = true} : vector<3x128xf32> -> vector<3x128xf32>
    %207 = arith.mulf %205, %206 : vector<3x128xf32>
    %cst_26 = arith.constant 2.000000e+00 : f32
    %208 = vector.broadcast %cst_26 : f32 to vector<3x128xf32>
    %209 = arith.subf %208, %207 : vector<3x128xf32>
    %210 = arith.mulf %206, %209 : vector<3x128xf32>
    %cst_27 = arith.constant 2.000000e+00 : f32
    %211 = vector.broadcast %cst_27 : f32 to vector<3x128xf32>
    %212 = arith.mulf %211, %199 : vector<3x128xf32>
    %213 = arith.mulf %212, %210 : vector<3x128xf32>
    %cst_28 = arith.constant -2.000000e+00 : f32
    %214 = vector.broadcast %cst_28 : f32 to vector<3x128xf32>
    %215 = arith.mulf %214, %202 : vector<3x128xf32>
    %216 = arith.mulf %215, %210 : vector<3x128xf32>
    %217 = arith.mulf %213, %4 : vector<3x128xf32>
    %218 = arith.mulf %216, %6 : vector<3x128xf32>
    %219 = arith.subf %217, %218 : vector<3x128xf32>
    %220 = arith.mulf %213, %6 : vector<3x128xf32>
    %221 = arith.mulf %216, %4 : vector<3x128xf32>
    %222 = arith.addf %220, %221 : vector<3x128xf32>
    %c0_29 = arith.constant 0 : index
    %c0_30 = arith.constant 0 : index
    %c0_31 = arith.constant 0 : index
    %c0_32 = arith.constant 0 : index
    %223 = vector.load %arg3[%c0_29, %c0_30, %c0_31, %c0_32] : memref<1x2x3x128xf32, #tpu.memory_space<vmem>>, vector<1x1x3x128xf32>
    %224 = vector.shape_cast %223 : vector<1x1x3x128xf32> to vector<3x128xf32>
    %225 = vector.shape_cast %219 : vector<3x128xf32> to vector<1x1x3x128xf32>
    tpu.vector_store %arg3[%c0_29, %c0_30, %c0_31, %c0_32], %225 {strides = array<i32>} : memref<1x2x3x128xf32, #tpu.memory_space<vmem>>, vector<1x1x3x128xf32>,
    %c0_33 = arith.constant 0 : index
    %c1_34 = arith.constant 1 : index
    %c0_35 = arith.constant 0 : index
    %c0_36 = arith.constant 0 : index
    %226 = vector.load %arg3[%c0_33, %c1_34, %c0_35, %c0_36] : memref<1x2x3x128xf32, #tpu.memory_space<vmem>>, vector<1x1x3x128xf32>
    %227 = vector.shape_cast %226 : vector<1x1x3x128xf32> to vector<3x128xf32>
    %228 = vector.shape_cast %222 : vector<3x128xf32> to vector<1x1x3x128xf32>
    tpu.vector_store %arg3[%c0_33, %c1_34, %c0_35, %c0_36], %228 {strides = array<i32>} : memref<1x2x3x128xf32, #tpu.memory_space<vmem>>, vector<1x1x3x128xf32>,
    return
  }
  func.func @transform_0(%arg0: i32) -> i32 {
    %c0_i32 = arith.constant 0 : i32
    %c0_i32_0 = arith.constant 0 : i32
    return %c0_i32 : i32
  }
  func.func @transform_1(%arg0: i32) -> (i32, i32, i32) {
    %c0_i32 = arith.constant 0 : i32
    %c0_i32_0 = arith.constant 0 : i32
    %c0_i32_1 = arith.constant 0 : i32
    %c0_i32_2 = arith.constant 0 : i32
    return %c0_i32, %c0_i32_0, %c0_i32_1 : i32, i32, i32
  }
  func.func @transform_2(%arg0: i32) -> (i32, i32, i32, i32) {
    %c0_i32 = arith.constant 0 : i32
    %c0_i32_0 = arith.constant 0 : i32
    %c0_i32_1 = arith.constant 0 : i32
    %c0_i32_2 = arith.constant 0 : i32
    return %arg0, %c0_i32, %c0_i32_0, %c0_i32_1 : i32, i32, i32, i32
  }
}

</mosaic_0001>

<llo_original>
// kernel: reverse.2
$region0: #{reverse.2}
  %s0 = inlined_call_operand.vmem [shape: f32[1,256], index: 0, kind: input, shape index: {}]
  %s1 = inlined_call_operand.vmem [shape: f32[1,256], index: 1, kind: output, shape index: {}]
  %v2 = vlaneseq
  %v3 = vsub.s32 127, %v2
  %4 = vset.pattern.permute.xlu0 %v3
  $region1: #{reverse.2} parent=0
    #allocation0 [shape = 'u8[4096]{0}', space=vmem, size = 0x1000, scoped, tag = 'operand span for operand 0']
    #allocation1 [shape = 'u8[1024]{0}', space=vmem, size = 0x400, scoped, tag = 'packed  for operand 0']
    #allocation2 [shape = 'u8[4096]{0}', space=vmem, size = 0x1000, scoped, tag = 'operand span for operand 1']
    #allocation3 [shape = 'u8[1024]{0}', space=vmem, size = 0x400, scoped, tag = 'packed  for operand 1']
    loop: start=0, step=1, limit=4
    $region2: #{reverse.2} parent=1 // loop_pre_header
      _
    $region3: #{reverse.2} parent=1 // loop_header
      %s6 = sphi 0, %s10
      %p7 = scmp.ge.s32.totalorder %s6, 4
      %s13 = sphi 0, %s25
      %s14 = sphi 0, %s21
      %s15 = sphi 0, %s13
      %s16 = sphi 0, %s14
      %s17 = sphi 0, %s15
      %s18 = sphi 0, %s16
    $region4: #{reverse.2} parent=1 // loop_header_branch
      %9 = sbr.rel (%p7) target = $region8
    $region5: #{reverse.2} parent=1 // loop_body
      %s11 = ssub.s32 %s6, 1
      %s12 = ssub.s32 %s6, 2
      %s19 = sadd.s32 1, %s14
      %p20 = scmp.ge.s32.totalorder %s19, 2
      %s21 = scalar_select %p20, 0, %s19
      %s22 = sadd.s32 1, %s13
      %s23 = scalar_select %p20, %s22, %s13
      %p24 = scmp.ge.s32.totalorder %s23, 1
      %s25 = scalar_select %p24, 0, %s23
      %p26 = scmp.le.s32.totalorder 1, %s6
      %p27 = scmp.lt.s32.totalorder %s6, 3
      %p28 = pnand %p26, %p27
      %p29 = pneg %p28
      // Predicated region
      $region9: #{reverse.2} parent=5 // pred_check
        _
      $region10: #{reverse.2} parent=5 // pred_check_branch
        %31 = sbr.rel (%p28) target = $region12
      $region11: #{reverse.2} parent=5 // pred_region
        %s32 = ssub.s32 %s6, 1
      $region12: #{reverse.2} parent=5 // pred_fallthru
        _
      %p33 = scmp.lt.s32.totalorder %s6, 2
      // Predicated region
      $region13: #{reverse.2} parent=5 // pred_check
        %p34 = pneg %p33
      $region14: #{reverse.2} parent=5 // pred_check_branch
        %36 = sbr.rel (%p34) target = $region16
      $region15: #{reverse.2} parent=5 // pred_region
        %s37 = sand.u32 %s6, 1
        %s38 = sand.u32 %s6, 1
        %s39 = scalar_lea.vmem [#allocation1], %s38
        %s40 = ssub.s32 1, %s14
        %s41 = smul.addr %s13, 2
        %s42 = sadd.s32 %s40, %s41
        %s43 = scalar_lea.vmem %s0, %s42
        // Predicated region
        $region17: #{reverse.2} parent=15 // pred_check
          _
        $region18: #{reverse.2} parent=15 // pred_check_branch
          %45 = sbr.rel (0) target = $region20
        $region19: #{reverse.2} parent=15 // pred_region
          // Predicated region
          $region21: #{reverse.2} parent=19 // pred_check
            _
          $region22: #{reverse.2} parent=19 // pred_check_branch
            %47 = sbr.rel target = $region24
          $region23: #{reverse.2} parent=19 // pred_region
            // Predicated region
            $region36: #{reverse.2} parent=23 // pred_check
              _
            $region37: #{reverse.2} parent=23 // pred_check_branch
              %62 = sbr.rel (0) target = $region39
            $region38: #{reverse.2} parent=23 // pred_region
              loop: start=0, step=1, limit=1
              $region40: #{reverse.2} parent=38 // loop_pre_header
                _
              $region41: #{reverse.2} parent=38 // loop_header
                %s65 = sphi 0, %s69
                %p66 = scmp.ge.s32.totalorder %s65, 1
                %s70 = sphi %s43, %s43
                %s71 = sphi %s39, %s39
              $region42: #{reverse.2} parent=38 // loop_header_branch
                %68 = sbr.rel (%p66) target = $region46
              $region43: #{reverse.2} parent=38 // loop_body
                %v72 = vld [vmem:[%s70] sm:$0x1]
                %73 = vst [vmem:[%s71] sm:$0x1] %v72
              $region44: #{reverse.2} parent=38 // loop_footer
                %s69 = sadd.s32 1, %s65
              $region45: #{reverse.2} parent=38 // loop_footer_branch
                %64 = sbr.rel target = $region41
              $region46: #{reverse.2} parent=38 // loop_exit
                _
            $region39: #{reverse.2} parent=23 // pred_fallthru
              _
          $region24: #{reverse.2} parent=19 // pred_fallthru
            _
          // Predicated region
          $region25: #{reverse.2} parent=19 // pred_check
            _
          $region26: #{reverse.2} parent=19 // pred_check_branch
            %49 = sbr.rel (0) target = $region28
          $region27: #{reverse.2} parent=19 // pred_region
            loop: start=0, step=1, limit=1
            $region29: #{reverse.2} parent=27 // loop_pre_header
              _
            $region30: #{reverse.2} parent=27 // loop_header
              %s52 = sphi 0, %s56
              %p53 = scmp.ge.s32.totalorder %s52, 1
              %s57 = sphi %s43, %s43
              %s58 = sphi %s39, %s39
            $region31: #{reverse.2} parent=27 // loop_header_branch
              %55 = sbr.rel (%p53) target = $region35
            $region32: #{reverse.2} parent=27 // loop_body
              %v59 = vld [vmem:[%s57] sm:$0x1]
              %60 = vst [vmem:[%s58] sm:$0x1] %v59
            $region33: #{reverse.2} parent=27 // loop_footer
              %s56 = sadd.s32 1, %s52
            $region34: #{reverse.2} parent=27 // loop_footer_branch
              %51 = sbr.rel target = $region30
            $region35: #{reverse.2} parent=27 // loop_exit
              _
          $region28: #{reverse.2} parent=19 // pred_fallthru
            _
        $region20: #{reverse.2} parent=15 // pred_fallthru
          _
        %74 = vnop
      $region16: #{reverse.2} parent=5 // pred_fallthru
        _
      %p75 = scmp.le.s32.totalorder 1, %s6
      %p76 = scmp.lt.s32.totalorder %s6, 3
      %p77 = pnand %p75, %p76
      %p78 = pneg %p77
      // Predicated region
      $region47: #{reverse.2} parent=5 // pred_check
        _
      $region48: #{reverse.2} parent=5 // pred_check_branch
        %80 = sbr.rel (%p77) target = $region50
      $region49: #{reverse.2} parent=5 // pred_region
        %s81 = ssub.s32 %s6, 1
        %s82 = sand.u32 %s11, 1
        %s83 = sand.u32 %s11, 1
        %s84 = scalar_lea.vmem [#allocation1], %s83
        %s85 = sand.u32 %s11, 1
        %s86 = sand.u32 %s11, 1
        %s87 = scalar_lea.vmem [#allocation1], %s86
        %s88 = sand.u32 %s11, 1
        %s89 = sand.u32 %s11, 1
        %s90 = scalar_lea.vmem [#allocation3], %s89
        %s92 = sshllo.u32 0, 1
        %v93 = vld [vmem:[%s87] sm:%s92]
        %94 = vst [vmem:[#allocation0] sm:%s92] %v93
        %s95 = ssub.s32 1, %s16
        %v96 = vld [vmem:[#allocation0] sm:$0xff]
        %97 = vperm.xlu0 %4, %v96
        %v98 = vpop.permute.xlu0 %97
        %99 = vst [vmem:[#allocation2] sm:$0xff] %v98
        %s101 = sshllo.u32 0, 1
        %v103 = vld [vmem:[#allocation2] sm:%s101]
        %s104 = sshllo.u32 0, 1
        %105 = vst [vmem:[%s90] sm:%s104] %v103
        %s106 = sand.u32 %s11, 1
        %s107 = sand.u32 %s11, 1
        %s108 = scalar_lea.vmem [#allocation3], %s107
        %s109 = smul.addr %s15, 2
        %s110 = sadd.s32 %s16, %s109
        %s111 = scalar_lea.vmem %s1, %s110
        // Predicated region
        $region51: #{reverse.2} parent=49 // pred_check
          _
        $region52: #{reverse.2} parent=49 // pred_check_branch
          %113 = sbr.rel (0) target = $region54
        $region53: #{reverse.2} parent=49 // pred_region
          // Predicated region
          $region55: #{reverse.2} parent=53 // pred_check
            _
          $region56: #{reverse.2} parent=53 // pred_check_branch
            %115 = sbr.rel target = $region58
          $region57: #{reverse.2} parent=53 // pred_region
            // Predicated region
            $region70: #{reverse.2} parent=57 // pred_check
              _
            $region71: #{reverse.2} parent=57 // pred_check_branch
              %130 = sbr.rel (0) target = $region73
            $region72: #{reverse.2} parent=57 // pred_region
              loop: start=0, step=1, limit=1
              $region74: #{reverse.2} parent=72 // loop_pre_header
                _
              $region75: #{reverse.2} parent=72 // loop_header
                %s133 = sphi 0, %s137
                %p134 = scmp.ge.s32.totalorder %s133, 1
                %s138 = sphi %s108, %s108
                %s139 = sphi %s111, %s111
              $region76: #{reverse.2} parent=72 // loop_header_branch
                %136 = sbr.rel (%p134) target = $region80
              $region77: #{reverse.2} parent=72 // loop_body
                %v140 = vld [vmem:[%s138] sm:$0x1]
                %141 = vst [vmem:[%s139] sm:$0x1] %v140
              $region78: #{reverse.2} parent=72 // loop_footer
                %s137 = sadd.s32 1, %s133
              $region79: #{reverse.2} parent=72 // loop_footer_branch
                %132 = sbr.rel target = $region75
              $region80: #{reverse.2} parent=72 // loop_exit
                _
            $region73: #{reverse.2} parent=57 // pred_fallthru
              _
          $region58: #{reverse.2} parent=53 // pred_fallthru
            _
          // Predicated region
          $region59: #{reverse.2} parent=53 // pred_check
            _
          $region60: #{reverse.2} parent=53 // pred_check_branch
            %117 = sbr.rel (0) target = $region62
          $region61: #{reverse.2} parent=53 // pred_region
            loop: start=0, step=1, limit=1
            $region63: #{reverse.2} parent=61 // loop_pre_header
              _
            $region64: #{reverse.2} parent=61 // loop_header
              %s120 = sphi 0, %s124
              %p121 = scmp.ge.s32.totalorder %s120, 1
              %s125 = sphi %s108, %s108
              %s126 = sphi %s111, %s111
            $region65: #{reverse.2} parent=61 // loop_header_branch
              %123 = sbr.rel (%p121) target = $region69
            $region66: #{reverse.2} parent=61 // loop_body
              %v127 = vld [vmem:[%s125] sm:$0x1]
              %128 = vst [vmem:[%s126] sm:$0x1] %v127
            $region67: #{reverse.2} parent=61 // loop_footer
              %s124 = sadd.s32 1, %s120
            $region68: #{reverse.2} parent=61 // loop_footer_branch
              %119 = sbr.rel target = $region64
            $region69: #{reverse.2} parent=61 // loop_exit
              _
          $region62: #{reverse.2} parent=53 // pred_fallthru
            _
        $region54: #{reverse.2} parent=49 // pred_fallthru
          _
        %142 = vnop
      $region50: #{reverse.2} parent=5 // pred_fallthru
        _
      %p143 = scmp.le.s32.totalorder 2, %s6
      // Predicated region
      $region81: #{reverse.2} parent=5 // pred_check
        %p144 = pneg %p143
      $region82: #{reverse.2} parent=5 // pred_check_branch
        %146 = sbr.rel (%p144) target = $region84
      $region83: #{reverse.2} parent=5 // pred_region
        %s147 = ssub.s32 %s6, 2
        %s148 = sand.u32 %s12, 1
        %s149 = sand.u32 %s12, 1
        %s150 = scalar_lea.vmem [#allocation3], %s149
      $region84: #{reverse.2} parent=5 // pred_fallthru
        _
    $region6: #{reverse.2} parent=1 // loop_footer
      %s10 = sadd.s32 1, %s6
    $region7: #{reverse.2} parent=1 // loop_footer_branch
      %5 = sbr.rel target = $region3
    $region8: #{reverse.2} parent=1 // loop_exit
      _

// kernel: _lambda_.1
$region0: #{_lambda_.1}
  #allocation0 [shape = 'u32[]', space=smem, size = 0x4, offset = 0x4, fixed_abs, tag = 'smem constant byte address 0x4 - core index']
  #allocation1 [shape = 'u32[144,128]{1,0:T(1,128)}', space=vmem, size = 0x12000, scoped, tag = 'internal scratch']
  %s0 = inlined_call_operand.vmem [shape: f32[12], index: 0, kind: input, shape index: {}]
  %s1 = inlined_call_operand.vmem [shape: f32[3,3,128], index: 1, kind: input, shape index: {}]
  %s2 = inlined_call_operand.vmem [shape: f32[1,2,3,128], index: 2, kind: output, shape index: {}]
  %s3 = sld [smem:[#allocation0]]
  $region22: #{_lambda_.1} parent=0
    _
  %s5 = ssub.s32 1, %s3
  %s6 = scalar_select 0, %s5, %s3
  $region1: #{_lambda_.1} parent=0
    #allocation2 [shape = 'u8[512]{0}', space=smem, size = 0x200, scoped, tag = 'input window, operand 0, single buffered']
    #allocation3 [shape = 's32[1]{0}', space=sflag, size = 0x4, scoped, tag = 'scoped memory for _lambda_.1']
    %7 = vsyncpa [#allocation3], 0
    // Predicated region
    $region2: #{_lambda_.1} parent=1 // pred_check
      _
    $region3: #{_lambda_.1} parent=1 // pred_check_branch
      %9 = sbr.rel (0) target = $region5
    $region4: #{_lambda_.1} parent=1 // pred_region
      %s11 = ssub.s32 16, 16
      %12 = vsyncadd [#allocation3], %s11
      %s14 = sshll.u32 %s0, 4
      %s15 = int_to_ptr.vmem [resolvable:$true] %s14
      %17 = dma.vmem_to_smem %s15, 16, [#allocation2], [#allocation3]
    $region5: #{_lambda_.1} parent=1 // pred_fallthru
      _
    // Predicated region
    $region6: #{_lambda_.1} parent=1 // pred_check
      _
    $region7: #{_lambda_.1} parent=1 // pred_check_branch
      %19 = sbr.rel (0) target = $region9
    $region8: #{_lambda_.1} parent=1 // pred_region
      _
    $region9: #{_lambda_.1} parent=1 // pred_fallthru
      _
    // Predicated region
    $region10: #{_lambda_.1} parent=1 // pred_check
      _
    $region11: #{_lambda_.1} parent=1 // pred_check_branch
      %21 = sbr.rel (0) target = $region13
    $region12: #{_lambda_.1} parent=1 // pred_region
      %22 = dma.done [#allocation3], 16
    $region13: #{_lambda_.1} parent=1 // pred_fallthru
      _
    %23 = sfence
    %s24 = smul.u32 0, 12
    %v25 = vld [vmem:[%s1] sm:$0x7]
    %s26 = scalar_lea.vmem %s1, 4
    %v27 = vld [vmem:[%s26] sm:$0x7]
    %s28 = scalar_lea.vmem %s1, 8
    %v29 = vld [vmem:[%s28] sm:$0x7]
    %s30 = sld [smem:[#allocation2 + %s24]]
    %s31 = sadd.s32 %s24, 1
    %s32 = sld [smem:[#allocation2 + %s31]]
    %s33 = sadd.s32 %s24, 2
    %s34 = sld [smem:[#allocation2 + %s33]]
    %s35 = sadd.s32 %s24, 3
    %s36 = sld [smem:[#allocation2 + %s35]]
    %s37 = sadd.s32 %s24, 4
    %s38 = sld [smem:[#allocation2 + %s37]]
    %s39 = sadd.s32 %s24, 5
    %s40 = sld [smem:[#allocation2 + %s39]]
    %v41 = vstv %s30
    %v42 = vmul.f32 %v41, %v25
    %v43 = vstv %s32
    %v44 = vmul.f32 %v43, %v25
    %v45 = vmax.f32 %v44, -20.0
    %v46 = vmin.f32 %v45, 20.0
    %v47 = vand.u32 2147483647, %v42
    %vm48 = vcmp.le.f32.partialorder %v47, 0.7853982
    %vm49 = vcmp.lt.s32.totalorder %v42, 0
    %v50 = vand.u32 %v42, 2139095040
    %v51 = vshrl.u32 %v50, 23
    %v52 = vsub.s32 %v51, 127
    %v53 = vand.u32 2147483647, %v42
    %v54 = vand.u32 %v53, 8388607
    %v55 = vor.u32 %v54, 8388608
    %v56 = vsub.s32 0, %v55
    %v57 = vadd.s32 %v52, 1
    %vm58 = vcmp.gt.s32.totalorder %v57, 0
    %v59 = vsel %vm58, %v57, 0
    %v60 = vshrl.u32 %v59, 5
    %v61 = vand.u32 %v59, 31
    %v62 = vsub.s32 32, %v61
    %v63 = vshrl.u32 683565275, %v62
    %v64 = vshll.u32 683565275, %v61
    %v65 = vshrl.u32 2475754826, %v62
    %v66 = vor.u32 %v64, %v65
    %v67 = vshll.u32 2475754826, %v61
    %v68 = vshrl.u32 2131351028, %v62
    %v69 = vor.u32 %v67, %v68
    %v70 = vshll.u32 2131351028, %v61
    %v71 = vshrl.u32 2102212464, %v62
    %v72 = vor.u32 %v70, %v71
    %v73 = vshll.u32 2102212464, %v61
    %v74 = vshrl.u32 920167782, %v62
    %v75 = vor.u32 %v73, %v74
    %v76 = vshll.u32 920167782, %v61
    %v77 = vshrl.u32 1326507024, %v62
    %v78 = vor.u32 %v76, %v77
    %vm79 = vcmp.lt.s32.totalorder %v60, 1
    %vm80 = vcmp.lt.s32.totalorder %v60, 2
    %vm81 = vcmp.lt.s32.totalorder %v60, 3
    %vm82 = vcmp.lt.s32.totalorder %v60, 4
    %v83 = vsel %vm79, %v63, %v66
    %v84 = vsel %vm82, %v72, 2102212464
    %v85 = vsel %vm81, %v69, %v84
    %v86 = vsel %vm80, %v83, %v85
    %v87 = vsel %vm79, %v66, %v69
    %v88 = vsel %vm82, %v75, 920167782
    %v89 = vsel %vm81, %v72, %v88
    %v90 = vsel %vm80, %v87, %v89
    %v91 = vsel %vm79, %v69, %v72
    %v92 = vsel %vm82, %v78, 1326507024
    %v93 = vsel %vm81, %v75, %v92
    %v94 = vsel %vm80, %v91, %v93
    %v95 = vshll.u32 %v55, 8
    %v96 = vmul.u32.u64.compose %v95, %v94
    %v97 = vextract.low.u32 %v96
    %v98 = vextract.high.u32 %v96
    %v99 = vmul.u32.u64.compose %v95, %v90
    %v100 = vextract.low.u32 %v99
    %v101 = vextract.high.u32 %v99
    %v102 = vmul.u32 %v95, %v86
    %v103 = vadd.s32 %v98, %v100
    %vm104 = vc.u32 %v98, %v100
    %v105 = vadd.s32 %v101, 1
    %v106 = vsel %vm104, %v105, %v101
    %v107 = vadd.s32 %v102, %v106
    %v108 = vadd.s32 %v107, 536870912
    %v109 = vshrl.u32 %v108, 30
    %v110 = vshll.u32 %v109, 30
    %v111 = vsub.s32 %v107, %v110
    %vm112 = vcmp.lt.s32.totalorder %v111, 0
    %v113 = vsub.s32 0, %v111
    %v114 = vsel %vm112, %v113, %v111
    %v115 = vclz %v114
    %v116 = vsub.s32 %v115, 2
    %vm117 = vcmp.gt.s32.totalorder 0, %v116
    %v118 = vsel %vm117, 0, %v116
    %v119 = vsub.s32 32, %v118
    %v120 = vshll.u32 %v111, %v118
    %v121 = vshrl.u32 %v103, %v119
    %v122 = vor.u32 %v120, %v121
    %v123 = vsub.s32 4294967266, %v118
    %v124 = vadd.s32 %v123, 127
    %v125 = vshll.u32 %v124, 23
    %v126 = vor.u32 4788187, %v125
    %v127 = vand.u32 2147483647, %v126
    %v129 = vcvt.s32.f32 %v122
    %v130 = vmul.f32 %v129, %v127
    %v131 = vxor.u32 %v130, 2147483648
    %v132 = vsel %vm49, %v131, %v130
    %v133 = vsub.s32 4, %v109
    %v134 = vsel %vm49, %v133, %v109
    %v135 = vsel %vm48, %v42, %v132
    %v136 = vsel %vm48, 0, %v134
    %v137 = vcosq.f32.pop %v135
    %v138 = vsinq.f32.pop %v135
    %vm139 = vweird.f32 %v42
    %v140 = vand.u32 %v136, 3
    %vm141 = vcmp.lt.s32.totalorder %v140, 2
    %vm142 = vcmp.eq.s32.totalorder %v140, 0
    %v143 = vxor.u32 %v138, 2147483648
    %v144 = vsel %vm142, %v137, %v143
    %vm145 = vcmp.eq.s32.totalorder %v140, 2
    %v146 = vxor.u32 %v137, 2147483648
    %v147 = vsel %vm145, %v146, %v138
    %v148 = vsel %vm141, %v144, %v147
    %v149 = vsel %vm139, nan, %v148
    %v150 = vand.u32 2147483647, %v42
    %vm151 = vcmp.le.f32.partialorder %v150, 0.7853982
    %vm152 = vcmp.lt.s32.totalorder %v42, 0
    %v153 = vand.u32 %v42, 2139095040
    %v154 = vshrl.u32 %v153, 23
    %v155 = vsub.s32 %v154, 127
    %v156 = vand.u32 2147483647, %v42
    %v157 = vand.u32 %v156, 8388607
    %v158 = vor.u32 %v157, 8388608
    %v159 = vsub.s32 0, %v158
    %v160 = vadd.s32 %v155, 1
    %vm161 = vcmp.gt.s32.totalorder %v160, 0
    %v162 = vsel %vm161, %v160, 0
    %v163 = vshrl.u32 %v162, 5
    %v164 = vand.u32 %v162, 31
    %v165 = vsub.s32 32, %v164
    %v166 = vshrl.u32 683565275, %v165
    %v167 = vshll.u32 683565275, %v164
    %v168 = vshrl.u32 2475754826, %v165
    %v169 = vor.u32 %v167, %v168
    %v170 = vshll.u32 2475754826, %v164
    %v171 = vshrl.u32 2131351028, %v165
    %v172 = vor.u32 %v170, %v171
    %v173 = vshll.u32 2131351028, %v164
    %v174 = vshrl.u32 2102212464, %v165
    %v175 = vor.u32 %v173, %v174
    %v176 = vshll.u32 2102212464, %v164
    %v177 = vshrl.u32 920167782, %v165
    %v178 = vor.u32 %v176, %v177
    %v179 = vshll.u32 920167782, %v164
    %v180 = vshrl.u32 1326507024, %v165
    %v181 = vor.u32 %v179, %v180
    %vm182 = vcmp.lt.s32.totalorder %v163, 1
    %vm183 = vcmp.lt.s32.totalorder %v163, 2
    %vm184 = vcmp.lt.s32.totalorder %v163, 3
    %vm185 = vcmp.lt.s32.totalorder %v163, 4
    %v186 = vsel %vm182, %v166, %v169
    %v187 = vsel %vm185, %v175, 2102212464
    %v188 = vsel %vm184, %v172, %v187
    %v189 = vsel %vm183, %v186, %v188
    %v190 = vsel %vm182, %v169, %v172
    %v191 = vsel %vm185, %v178, 920167782
    %v192 = vsel %vm184, %v175, %v191
    %v193 = vsel %vm183, %v190, %v192
    %v194 = vsel %vm182, %v172, %v175
    %v195 = vsel %vm185, %v181, 1326507024
    %v196 = vsel %vm184, %v178, %v195
    %v197 = vsel %vm183, %v194, %v196
    %v198 = vshll.u32 %v158, 8
    %v199 = vmul.u32.u64.compose %v198, %v197
    %v200 = vextract.low.u32 %v199
    %v201 = vextract.high.u32 %v199
    %v202 = vmul.u32.u64.compose %v198, %v193
    %v203 = vextract.low.u32 %v202
    %v204 = vextract.high.u32 %v202
    %v205 = vmul.u32 %v198, %v189
    %v206 = vadd.s32 %v201, %v203
    %vm207 = vc.u32 %v201, %v203
    %v208 = vadd.s32 %v204, 1
    %v209 = vsel %vm207, %v208, %v204
    %v210 = vadd.s32 %v205, %v209
    %v211 = vadd.s32 %v210, 536870912
    %v212 = vshrl.u32 %v211, 30
    %v213 = vshll.u32 %v212, 30
    %v214 = vsub.s32 %v210, %v213
    %vm215 = vcmp.lt.s32.totalorder %v214, 0
    %v216 = vsub.s32 0, %v214
    %v217 = vsel %vm215, %v216, %v214
    %v218 = vclz %v217
    %v219 = vsub.s32 %v218, 2
    %vm220 = vcmp.gt.s32.totalorder 0, %v219
    %v221 = vsel %vm220, 0, %v219
    %v222 = vsub.s32 32, %v221
    %v223 = vshll.u32 %v214, %v221
    %v224 = vshrl.u32 %v206, %v222
    %v225 = vor.u32 %v223, %v224
    %v226 = vsub.s32 4294967266, %v221
    %v227 = vadd.s32 %v226, 127
    %v228 = vshll.u32 %v227, 23
    %v229 = vor.u32 4788187, %v228
    %v230 = vand.u32 2147483647, %v229
    %v232 = vcvt.s32.f32 %v225
    %v233 = vmul.f32 %v232, %v230
    %v234 = vxor.u32 %v233, 2147483648
    %v235 = vsel %vm152, %v234, %v233
    %v236 = vsub.s32 4, %v212
    %v237 = vsel %vm152, %v236, %v212
    %v238 = vsel %vm151, %v42, %v235
    %v239 = vsel %vm151, 0, %v237
    %v240 = vcosq.f32.pop %v238
    %v241 = vsinq.f32.pop %v238
    %vm242 = vweird.f32 %v42
    %v243 = vadd.s32 %v239, 3
    %v244 = vand.u32 %v243, 3
    %vm245 = vcmp.lt.s32.totalorder %v244, 2
    %vm246 = vcmp.eq.s32.totalorder %v244, 0
    %v247 = vxor.u32 %v241, 2147483648
    %v248 = vsel %vm246, %v240, %v247
    %vm249 = vcmp.eq.s32.totalorder %v244, 2
    %v250 = vxor.u32 %v240, 2147483648
    %v251 = vsel %vm249, %v250, %v241
    %v252 = vsel %vm245, %v248, %v251
    %v253 = vsel %vm242, nan, %v252
    %v254 = vmul.f32 %v46, 1.442695
    %v255 = vpow.pop %v254
    %v256 = vsub.f32 0.0, %v46
    %v257 = vmul.f32 %v256, 1.442695
    %v258 = vpow.pop %v257
    %v259 = vadd.f32 %v255, %v258
    %v260 = vmul.f32 %v259, 0.5
    %v261 = vsub.f32 %v255, %v258
    %v262 = vmul.f32 %v261, 0.5
    %v263 = vmul.f32 %v149, %v260
    %v264 = vsub.f32 0.0, %v253
    %v265 = vmul.f32 %v264, %v262
    %v266 = vmul.f32 %v253, %v260
    %v267 = vmul.f32 %v149, %v262
    %v268 = vsub.f32 0.0, %v267
    %v269 = vstv %s38
    %v270 = vmul.f32 %v268, %v269
    %v271 = vstv %s40
    %v272 = vmul.f32 %v266, %v271
    %v273 = vsub.f32 %v270, %v272
    %v274 = vmul.f32 %v268, %v271
    %v275 = vmul.f32 %v266, %v269
    %v276 = vadd.f32 %v274, %v275
    %v277 = vstv %s34
    %v278 = vmul.f32 %v268, %v277
    %v279 = vstv %s36
    %v280 = vmul.f32 %v266, %v279
    %v281 = vsub.f32 %v278, %v280
    %v282 = vmul.f32 %v268, %v279
    %v283 = vmul.f32 %v266, %v277
    %v284 = vadd.f32 %v282, %v283
    %s285 = sadd.s32 %s24, 6
    %s286 = sld [smem:[#allocation2 + %s285]]
    %s287 = sadd.s32 %s24, 7
    %s288 = sld [smem:[#allocation2 + %s287]]
    %s289 = sadd.s32 %s24, 8
    %s290 = sld [smem:[#allocation2 + %s289]]
    %s291 = sadd.s32 %s24, 9
    %s292 = sld [smem:[#allocation2 + %s291]]
    %s293 = sadd.s32 %s24, 10
    %s294 = sld [smem:[#allocation2 + %s293]]
    %s295 = sadd.s32 %s24, 11
    %s296 = sld [smem:[#allocation2 + %s295]]
    %v297 = vstv %s286
    %v298 = vmul.f32 %v297, %v25
    %v299 = vstv %s288
    %v300 = vmul.f32 %v299, %v25
    %v301 = vmax.f32 %v300, -20.0
    %v302 = vmin.f32 %v301, 20.0
    %v303 = vand.u32 2147483647, %v298
    %vm304 = vcmp.le.f32.partialorder %v303, 0.7853982
    %vm305 = vcmp.lt.s32.totalorder %v298, 0
    %v306 = vand.u32 %v298, 2139095040
    %v307 = vshrl.u32 %v306, 23
    %v308 = vsub.s32 %v307, 127
    %v309 = vand.u32 2147483647, %v298
    %v310 = vand.u32 %v309, 8388607
    %v311 = vor.u32 %v310, 8388608
    %v312 = vsub.s32 0, %v311
    %v313 = vadd.s32 %v308, 1
    %vm314 = vcmp.gt.s32.totalorder %v313, 0
    %v315 = vsel %vm314, %v313, 0
    %v316 = vshrl.u32 %v315, 5
    %v317 = vand.u32 %v315, 31
    %v318 = vsub.s32 32, %v317
    %v319 = vshrl.u32 683565275, %v318
    %v320 = vshll.u32 683565275, %v317
    %v321 = vshrl.u32 2475754826, %v318
    %v322 = vor.u32 %v320, %v321
    %v323 = vshll.u32 2475754826, %v317
    %v324 = vshrl.u32 2131351028, %v318
    %v325 = vor.u32 %v323, %v324
    %v326 = vshll.u32 2131351028, %v317
    %v327 = vshrl.u32 2102212464, %v318
    %v328 = vor.u32 %v326, %v327
    %v329 = vshll.u32 2102212464, %v317
    %v330 = vshrl.u32 920167782, %v318
    %v331 = vor.u32 %v329, %v330
    %v332 = vshll.u32 920167782, %v317
    %v333 = vshrl.u32 1326507024, %v318
    %v334 = vor.u32 %v332, %v333
    %vm335 = vcmp.lt.s32.totalorder %v316, 1
    %vm336 = vcmp.lt.s32.totalorder %v316, 2
    %vm337 = vcmp.lt.s32.totalorder %v316, 3
    %vm338 = vcmp.lt.s32.totalorder %v316, 4
    %v339 = vsel %vm335, %v319, %v322
    %v340 = vsel %vm338, %v328, 2102212464
    %v341 = vsel %vm337, %v325, %v340
    %v342 = vsel %vm336, %v339, %v341
    %v343 = vsel %vm335, %v322, %v325
    %v344 = vsel %vm338, %v331, 920167782
    %v345 = vsel %vm337, %v328, %v344
    %v346 = vsel %vm336, %v343, %v345
    %v347 = vsel %vm335, %v325, %v328
    %v348 = vsel %vm338, %v334, 1326507024
    %v349 = vsel %vm337, %v331, %v348
    %v350 = vsel %vm336, %v347, %v349
    %v351 = vshll.u32 %v311, 8
    %v352 = vmul.u32.u64.compose %v351, %v350
    %v353 = vextract.low.u32 %v352
    %v354 = vextract.high.u32 %v352
    %v355 = vmul.u32.u64.compose %v351, %v346
    %v356 = vextract.low.u32 %v355
    %v357 = vextract.high.u32 %v355
    %v358 = vmul.u32 %v351, %v342
    %v359 = vadd.s32 %v354, %v356
    %vm360 = vc.u32 %v354, %v356
    %v361 = vadd.s32 %v357, 1
    %v362 = vsel %vm360, %v361, %v357
    %v363 = vadd.s32 %v358, %v362
    %v364 = vadd.s32 %v363, 536870912
    %v365 = vshrl.u32 %v364, 30
    %v366 = vshll.u32 %v365, 30
    %v367 = vsub.s32 %v363, %v366
    %vm368 = vcmp.lt.s32.totalorder %v367, 0
    %v369 = vsub.s32 0, %v367
    %v370 = vsel %vm368, %v369, %v367
    %v371 = vclz %v370
    %v372 = vsub.s32 %v371, 2
    %vm373 = vcmp.gt.s32.totalorder 0, %v372
    %v374 = vsel %vm373, 0, %v372
    %v375 = vsub.s32 32, %v374
    %v376 = vshll.u32 %v367, %v374
    %v377 = vshrl.u32 %v359, %v375
    %v378 = vor.u32 %v376, %v377
    %v379 = vsub.s32 4294967266, %v374
    %v380 = vadd.s32 %v379, 127
    %v381 = vshll.u32 %v380, 23
    %v382 = vor.u32 4788187, %v381
    %v383 = vand.u32 2147483647, %v382
    %v385 = vcvt.s32.f32 %v378
    %v386 = vmul.f32 %v385, %v383
    %v387 = vxor.u32 %v386, 2147483648
    %v388 = vsel %vm305, %v387, %v386
    %v389 = vsub.s32 4, %v365
    %v390 = vsel %vm305, %v389, %v365
    %v391 = vsel %vm304, %v298, %v388
    %v392 = vsel %vm304, 0, %v390
    %v393 = vcosq.f32.pop %v391
    %v394 = vsinq.f32.pop %v391
    %vm395 = vweird.f32 %v298
    %v396 = vand.u32 %v392, 3
    %vm397 = vcmp.lt.s32.totalorder %v396, 2
    %vm398 = vcmp.eq.s32.totalorder %v396, 0
    %v399 = vxor.u32 %v394, 2147483648
    %v400 = vsel %vm398, %v393, %v399
    %vm401 = vcmp.eq.s32.totalorder %v396, 2
    %v402 = vxor.u32 %v393, 2147483648
    %v403 = vsel %vm401, %v402, %v394
    %v404 = vsel %vm397, %v400, %v403
    %v405 = vsel %vm395, nan, %v404
    %v406 = vand.u32 2147483647, %v298
    %vm407 = vcmp.le.f32.partialorder %v406, 0.7853982
    %vm408 = vcmp.lt.s32.totalorder %v298, 0
    %v409 = vand.u32 %v298, 2139095040
    %v410 = vshrl.u32 %v409, 23
    %v411 = vsub.s32 %v410, 127
    %v412 = vand.u32 2147483647, %v298
    %v413 = vand.u32 %v412, 8388607
    %v414 = vor.u32 %v413, 8388608
    %v415 = vsub.s32 0, %v414
    %v416 = vadd.s32 %v411, 1
    %vm417 = vcmp.gt.s32.totalorder %v416, 0
    %v418 = vsel %vm417, %v416, 0
    %v419 = vshrl.u32 %v418, 5
    %v420 = vand.u32 %v418, 31
    %v421 = vsub.s32 32, %v420
    %v422 = vshrl.u32 683565275, %v421
    %v423 = vshll.u32 683565275, %v420
    %v424 = vshrl.u32 2475754826, %v421
    %v425 = vor.u32 %v423, %v424
    %v426 = vshll.u32 2475754826, %v420
    %v427 = vshrl.u32 2131351028, %v421
    %v428 = vor.u32 %v426, %v427
    %v429 = vshll.u32 2131351028, %v420
    %v430 = vshrl.u32 2102212464, %v421
    %v431 = vor.u32 %v429, %v430
    %v432 = vshll.u32 2102212464, %v420
    %v433 = vshrl.u32 920167782, %v421
    %v434 = vor.u32 %v432, %v433
    %v435 = vshll.u32 920167782, %v420
    %v436 = vshrl.u32 1326507024, %v421
    %v437 = vor.u32 %v435, %v436
    %vm438 = vcmp.lt.s32.totalorder %v419, 1
    %vm439 = vcmp.lt.s32.totalorder %v419, 2
    %vm440 = vcmp.lt.s32.totalorder %v419, 3
    %vm441 = vcmp.lt.s32.totalorder %v419, 4
    %v442 = vsel %vm438, %v422, %v425
    %v443 = vsel %vm441, %v431, 2102212464
    %v444 = vsel %vm440, %v428, %v443
    %v445 = vsel %vm439, %v442, %v444
    %v446 = vsel %vm438, %v425, %v428
    %v447 = vsel %vm441, %v434, 920167782
    %v448 = vsel %vm440, %v431, %v447
    %v449 = vsel %vm439, %v446, %v448
    %v450 = vsel %vm438, %v428, %v431
    %v451 = vsel %vm441, %v437, 1326507024
    %v452 = vsel %vm440, %v434, %v451
    %v453 = vsel %vm439, %v450, %v452
    %v454 = vshll.u32 %v414, 8
    %v455 = vmul.u32.u64.compose %v454, %v453
    %v456 = vextract.low.u32 %v455
    %v457 = vextract.high.u32 %v455
    %v458 = vmul.u32.u64.compose %v454, %v449
    %v459 = vextract.low.u32 %v458
    %v460 = vextract.high.u32 %v458
    %v461 = vmul.u32 %v454, %v445
    %v462 = vadd.s32 %v457, %v459
    %vm463 = vc.u32 %v457, %v459
    %v464 = vadd.s32 %v460, 1
    %v465 = vsel %vm463, %v464, %v460
    %v466 = vadd.s32 %v461, %v465
    %v467 = vadd.s32 %v466, 536870912
    %v468 = vshrl.u32 %v467, 30
    %v469 = vshll.u32 %v468, 30
    %v470 = vsub.s32 %v466, %v469
    %vm471 = vcmp.lt.s32.totalorder %v470, 0
    %v472 = vsub.s32 0, %v470
    %v473 = vsel %vm471, %v472, %v470
    %v474 = vclz %v473
    %v475 = vsub.s32 %v474, 2
    %vm476 = vcmp.gt.s32.totalorder 0, %v475
    %v477 = vsel %vm476, 0, %v475
    %v478 = vsub.s32 32, %v477
    %v479 = vshll.u32 %v470, %v477
    %v480 = vshrl.u32 %v462, %v478
    %v481 = vor.u32 %v479, %v480
    %v482 = vsub.s32 4294967266, %v477
    %v483 = vadd.s32 %v482, 127
    %v484 = vshll.u32 %v483, 23
    %v485 = vor.u32 4788187, %v484
    %v486 = vand.u32 2147483647, %v485
    %v488 = vcvt.s32.f32 %v481
    %v489 = vmul.f32 %v488, %v486
    %v490 = vxor.u32 %v489, 2147483648
    %v491 = vsel %vm408, %v490, %v489
    %v492 = vsub.s32 4, %v468
    %v493 = vsel %vm408, %v492, %v468
    %v494 = vsel %vm407, %v298, %v491
    %v495 = vsel %vm407, 0, %v493
    %v496 = vcosq.f32.pop %v494
    %v497 = vsinq.f32.pop %v494
    %vm498 = vweird.f32 %v298
    %v499 = vadd.s32 %v495, 3
    %v500 = vand.u32 %v499, 3
    %vm501 = vcmp.lt.s32.totalorder %v500, 2
    %vm502 = vcmp.eq.s32.totalorder %v500, 0
    %v503 = vxor.u32 %v497, 2147483648
    %v504 = vsel %vm502, %v496, %v503
    %vm505 = vcmp.eq.s32.totalorder %v500, 2
    %v506 = vxor.u32 %v496, 2147483648
    %v507 = vsel %vm505, %v506, %v497
    %v508 = vsel %vm501, %v504, %v507
    %v509 = vsel %vm498, nan, %v508
    %v510 = vmul.f32 %v302, 1.442695
    %v511 = vpow.pop %v510
    %v512 = vsub.f32 0.0, %v302
    %v513 = vmul.f32 %v512, 1.442695
    %v514 = vpow.pop %v513
    %v515 = vadd.f32 %v511, %v514
    %v516 = vmul.f32 %v515, 0.5
    %v517 = vsub.f32 %v511, %v514
    %v518 = vmul.f32 %v517, 0.5
    %v519 = vmul.f32 %v405, %v516
    %v520 = vsub.f32 0.0, %v509
    %v521 = vmul.f32 %v520, %v518
    %v522 = vmul.f32 %v509, %v516
    %v523 = vmul.f32 %v405, %v518
    %v524 = vsub.f32 0.0, %v523
    %v525 = vstv %s294
    %v526 = vmul.f32 %v524, %v525
    %v527 = vstv %s296
    %v528 = vmul.f32 %v522, %v527
    %v529 = vsub.f32 %v526, %v528
    %v530 = vmul.f32 %v524, %v527
    %v531 = vmul.f32 %v522, %v525
    %v532 = vadd.f32 %v530, %v531
    %v533 = vstv %s290
    %v534 = vmul.f32 %v524, %v533
    %v535 = vstv %s292
    %v536 = vmul.f32 %v522, %v535
    %v537 = vsub.f32 %v534, %v536
    %v538 = vmul.f32 %v524, %v535
    %v539 = vmul.f32 %v522, %v533
    %v540 = vadd.f32 %v538, %v539
    %v541 = vmul.f32 %v263, %v519
    %v542 = vmul.f32 %v265, %v521
    %v543 = vsub.f32 %v541, %v542
    %v544 = vmul.f32 %v263, %v521
    %v545 = vmul.f32 %v265, %v519
    %v546 = vadd.f32 %v544, %v545
    %v547 = vmul.f32 %v273, %v537
    %v548 = vmul.f32 %v276, %v540
    %v549 = vsub.f32 %v547, %v548
    %v550 = vmul.f32 %v273, %v540
    %v551 = vmul.f32 %v276, %v537
    %v552 = vadd.f32 %v550, %v551
    %v553 = vadd.f32 %v543, %v549
    %v554 = vadd.f32 %v546, %v552
    %v555 = vmul.f32 %v263, %v529
    %v556 = vmul.f32 %v265, %v532
    %v557 = vsub.f32 %v555, %v556
    %v558 = vmul.f32 %v263, %v532
    %v559 = vmul.f32 %v265, %v529
    %v560 = vadd.f32 %v558, %v559
    %v561 = vmul.f32 %v273, %v519
    %v562 = vmul.f32 %v276, %v521
    %v563 = vsub.f32 %v561, %v562
    %v564 = vmul.f32 %v273, %v521
    %v565 = vmul.f32 %v276, %v519
    %v566 = vadd.f32 %v564, %v565
    %v567 = vadd.f32 %v557, %v563
    %v568 = vadd.f32 %v560, %v566
    %v569 = vmul.f32 %v281, %v519
    %v570 = vmul.f32 %v284, %v521
    %v571 = vsub.f32 %v569, %v570
    %v572 = vmul.f32 %v281, %v521
    %v573 = vmul.f32 %v284, %v519
    %v574 = vadd.f32 %v572, %v573
    %v575 = vmul.f32 %v263, %v537
    %v576 = vmul.f32 %v265, %v540
    %v577 = vsub.f32 %v575, %v576
    %v578 = vmul.f32 %v263, %v540
    %v579 = vmul.f32 %v265, %v537
    %v580 = vadd.f32 %v578, %v579
    %v581 = vadd.f32 %v571, %v577
    %v582 = vadd.f32 %v574, %v580
    %v583 = vmul.f32 %v281, %v529
    %v584 = vmul.f32 %v284, %v532
    %v585 = vsub.f32 %v583, %v584
    %v586 = vmul.f32 %v281, %v532
    %v587 = vmul.f32 %v284, %v529
    %v588 = vadd.f32 %v586, %v587
    %v589 = vadd.f32 %v585, %v543
    %v590 = vadd.f32 %v588, %v546
    %v591 = vadd.f32 %v553, %v567
    %v592 = vadd.f32 %v591, %v581
    %v593 = vadd.f32 %v592, %v589
    %v594 = vadd.f32 %v554, %v568
    %v595 = vadd.f32 %v594, %v582
    %v596 = vadd.f32 %v595, %v590
    %v597 = vmul.f32 %v593, %v593
    %v598 = vmul.f32 %v596, %v596
    %v599 = vadd.f32 %v597, %v598
    %v600 = vrcp.pop %v599
    %v601 = vmul.f32 %v599, %v600
    %v602 = vsub.f32 2.0, %v601
    %v603 = vmul.f32 %v600, %v602
    %v604 = vmul.f32 %v593, 2.0
    %v605 = vmul.f32 %v604, %v603
    %v606 = vmul.f32 %v596, -2.0
    %v607 = vmul.f32 %v606, %v603
    %v608 = vmul.f32 %v605, %v27
    %v609 = vmul.f32 %v607, %v29
    %v610 = vsub.f32 %v608, %v609
    %v611 = vmul.f32 %v605, %v29
    %v612 = vmul.f32 %v607, %v27
    %v613 = vadd.f32 %v611, %v612
    %614 = vst [vmem:[%s2] sm:$0x7] %v610
    %s615 = scalar_lea.vmem %s2, 4
    %616 = vst [vmem:[%s615] sm:$0x7] %v613
    // Predicated region
    $region14: #{_lambda_.1} parent=1 // pred_check
      _
    $region15: #{_lambda_.1} parent=1 // pred_check_branch
      %618 = sbr.rel (0) target = $region17
    $region16: #{_lambda_.1} parent=1 // pred_region
      _
    $region17: #{_lambda_.1} parent=1 // pred_fallthru
      _
    // Predicated region
    $region18: #{_lambda_.1} parent=1 // pred_check
      _
    $region19: #{_lambda_.1} parent=1 // pred_check_branch
      %620 = sbr.rel (0) target = $region21
    $region20: #{_lambda_.1} parent=1 // pred_region
      _
    $region21: #{_lambda_.1} parent=1 // pred_fallthru
      _
    %621 = vsyncpa [#allocation3], 1

</llo_original>
